<compile_context>
chip_gen: v7x
topology: tpu7x:2x2x1
jax: 0.10.0
libtpu: 0.0.40
codegen_flags: <defaults>
</compile_context>

<pallas_src>
import functools

import numpy as np
import jax
import jax.numpy as jnp
from jax.experimental import pallas as pl
from jax.experimental.pallas import tpu as pltpu


def _round_up(x: int, m: int) -> int:
    return (x + m - 1) // m * m


def _pick_tile(dim: int, cap: int, align: int = 128) -> int:
    """Largest multiple of `align` that divides `dim` and is <= cap.

    `dim` must already be a multiple of `align` (so `align` always works).
    """
    best = align
    t = align
    limit = min(cap, dim)
    while t <= limit:
        if dim % t == 0:
            best = t
        t += align
    return best


# ----------------------------------------------------------------------------
# Kernels
# ----------------------------------------------------------------------------
def _linear_kernel_acc(x_ref, w_ref, b_ref, o_ref, acc_ref):
    """(M, N, K) grid, K last; f32 VMEM accumulator; bias added in epilogue."""
    k = pl.program_id(2)

    @pl.when(k == 0)
    def _init():
        acc_ref[...] = jnp.zeros_like(acc_ref)

    acc_ref[...] += jnp.dot(
        x_ref[...], w_ref[...], preferred_element_type=jnp.float32
    )

    @pl.when(k == pl.num_programs(2) - 1)
    def _finalize():
        o_ref[...] = (acc_ref[...] + b_ref[...].astype(jnp.float32)).astype(
            o_ref.dtype
        )


def _linear_kernel_single_k(x_ref, w_ref, b_ref, o_ref):
    """Fast path when the whole reduction fits one K tile: no scratch, no pl.when."""
    acc = jnp.dot(x_ref[...], w_ref[...], preferred_element_type=jnp.float32)
    o_ref[...] = (acc + b_ref[...].astype(jnp.float32)).astype(o_ref.dtype)


# ----------------------------------------------------------------------------
# Parameter preparation (run ONCE, outside the hot forward path)
# ----------------------------------------------------------------------------
def prepare_linear_params(w, b, *, compute_dtype=None):
    """Pad W/b to 128-aligned shapes (and optionally cast W) one time.

    Returns (wp, bp, d_out):
      wp: (Kp, Np) padded weight in compute dtype,
      bp: (1, Np) padded bias in f32 (bias add stays f32 in the epilogue),
      d_out: true output width (for slicing the padded result).
    """
    D_in, D_out = w.shape
    Kp = _round_up(D_in, 128)
    Np = _round_up(D_out, 128)
    wdt = compute_dtype if compute_dtype is not None else w.dtype
    wc = w.astype(wdt)
    if (Kp, Np) != (D_in, D_out):
        wp = jnp.zeros((Kp, Np), wdt).at[:D_in, :D_out].set(wc)
    else:
        wp = wc
    bp = jnp.zeros((1, Np), jnp.float32).at[0, :D_out].set(
        b.astype(jnp.float32).reshape(-1)
    )
    return wp, bp, D_out


# ----------------------------------------------------------------------------
# Forward
# ----------------------------------------------------------------------------
@functools.partial(jax.jit, static_argnames=("d_out", "compute_dtype"))
def linear_padded(x, wp, bp, *, d_out, compute_dtype=None):
    """y = x @ W + b, with W/b pre-padded by prepare_linear_params."""
    orig_shape = x.shape
    if x.ndim != 2:
        x = x.reshape(-1, orig_shape[-1])
    B, D_in = x.shape
    Kp, Np = wp.shape
    out_dtype = x.dtype
    cdt = compute_dtype if compute_dtype is not None else x.dtype

    # ---- tile-size selection --------------------------------------------
    Bp8 = _round_up(B, 8)
    if Bp8 <= 128:
        tm, Mp = Bp8, Bp8
    else:
        tm, Mp = None, None
        for cand in (512, 256, 128):          # ties keep the larger tile
            mp = _round_up(Bp8, cand)
            if Mp is None or (mp - Bp8) < (Mp - Bp8):
                tm, Mp = cand, mp
    tn = _pick_tile(Np, 512)
    tk = _pick_tile(Kp, 1024)

    # v7x megacore: keep >= 2 blocks along the parallel axes when it is cheap.
    if (Mp // tm) * (Np // tn) == 1:
        if Np >= 256:
            tn = _pick_tile(Np, Np // 2)
        elif Mp >= 16:
            tm = _pick_tile(Mp, Mp // 2, align=8)

    grid_m, grid_n, n_k = Mp // tm, Np // tn, Kp // tk

    # ---- pad x (only x is padded per call; W/b were pre-padded) ----------
    xc = x.astype(cdt)
    if (Mp, Kp) != (B, D_in):
        xp = jnp.zeros((Mp, Kp), cdt).at[:B, :D_in].set(xc)
    else:
        xp = xc

    # ---- VMEM budget + truthful cost estimate ----------------------------
    in_isz = np.dtype(cdt).itemsize
    out_isz = np.dtype(out_dtype).itemsize
    footprint = (
        2 * (tm * tk + tk * tn) * in_isz   # double-buffered x / w tiles
        + 2 * tn * 4                       # bias tile
        + 2 * tm * tn * out_isz            # output tile
        + tm * tn * 4                      # f32 accumulator scratch
    )
    vmem_limit = int(min(48 << 20, max(24 << 20, int(footprint * 1.5))))

    flops = 2 * Mp * Kp * Np
    bytes_accessed = (
        Mp * Kp * in_isz * grid_n      # x re-read once per N tile
        + Kp * Np * in_isz * grid_m    # W re-read once per M tile
        + Np * 4 * grid_m              # bias
        + Mp * Np * out_isz            # output write
    )
    cost = pl.CostEstimate(
        flops=flops, transcendentals=0, bytes_accessed=bytes_accessed
    )

    # ---- kernel launch ----------------------------------------------------
    if n_k == 1:
        out_p = pl.pallas_call(
            _linear_kernel_single_k,
            out_shape=jax.ShapeDtypeStruct((Mp, Np), out_dtype),
            grid=(grid_m, grid_n),
            in_specs=[
                pl.BlockSpec((tm, tk), lambda i, j: (i, 0)),
                pl.BlockSpec((tk, tn), lambda i, j: (0, j)),
                pl.BlockSpec((1, tn), lambda i, j: (0, j)),
            ],
            out_specs=pl.BlockSpec((tm, tn), lambda i, j: (i, j)),
            compiler_params=pltpu.CompilerParams(
                dimension_semantics=("parallel", "parallel"),
                vmem_limit_bytes=vmem_limit,
            ),
            cost_estimate=cost,
        )(xp, wp, bp)
    else:
        out_p = pl.pallas_call(
            _linear_kernel_acc,
            out_shape=jax.ShapeDtypeStruct((Mp, Np), out_dtype),
            grid=(grid_m, grid_n, n_k),
            in_specs=[
                pl.BlockSpec((tm, tk), lambda i, j, k: (i, k)),
                pl.BlockSpec((tk, tn), lambda i, j, k: (k, j)),
                pl.BlockSpec((1, tn), lambda i, j, k: (0, j)),
            ],
            out_specs=pl.BlockSpec((tm, tn), lambda i, j, k: (i, j)),
            scratch_shapes=[pltpu.VMEM((tm, tn), jnp.float32)],
            compiler_params=pltpu.CompilerParams(
                dimension_semantics=("parallel", "parallel", "arbitrary"),
                vmem_limit_bytes=vmem_limit,
            ),
            cost_estimate=cost,
        )(xp, wp, bp)

    out = out_p[:B, :d_out]
    if len(orig_shape) != 2:
        out = out.reshape(*orig_shape[:-1], d_out)
    return out


def simple_linear_encoder(x, w, b, *, compute_dtype=None):
    """Convenience one-shot wrapper (pads W per call). For repeated forwards,
    call prepare_linear_params once and reuse its outputs with linear_padded."""
    wp, bp, d_out = prepare_linear_params(w, b, compute_dtype=compute_dtype)
    return linear_padded(x, wp, bp, d_out=d_out, compute_dtype=compute_dtype)


if __name__ == "__main__":
    # Shapes implied by the module: batch=8, in_features=128, out_dim=32.
    B, D_IN, D_OUT = 8, 128, 32

    key = jax.random.PRNGKey(0)
    kx, kw, kb = jax.random.split(key, 3)

    x = jax.random.normal(kx, (B, D_IN), dtype=jnp.float32)
    bound = 1.0 / (D_IN ** 0.5)  # nn.Linear default init scale
    w = jax.random.uniform(
        kw, (D_IN, D_OUT), minval=-bound, maxval=bound, dtype=jnp.float32
    )
    b = jax.random.uniform(
        kb, (D_OUT,), minval=-bound, maxval=bound, dtype=jnp.float32
    )

    y_ref = x @ w + b

    # f32 path: exact nn.Linear forward semantics.
    wp, bp, d_out = prepare_linear_params(w, b)
    y = linear_padded(x, wp, bp, d_out=d_out)
    jax.block_until_ready(y)
    assert y.shape == (B, D_OUT)
    assert jnp.allclose(y, y_ref, atol=1e-5, rtol=1e-5)

    # bf16-input / f32-accumulation fast path (perf option; looser tolerance).
    wp16, bp16, d_out16 = prepare_linear_params(w, b, compute_dtype=jnp.bfloat16)
    y16 = linear_padded(x, wp16, bp16, d_out=d_out16, compute_dtype=jnp.bfloat16)
    jax.block_until_ready(y16)
    assert y16.shape == (B, D_OUT)
    assert jnp.allclose(y16.astype(jnp.float32), y_ref, atol=5e-2, rtol=5e-2)

    print("KERNEL_OK")
</pallas_src>

<mosaic_0001>
module attributes {stable_mosaic.version = 11 : i64} {
  func.func @_linear_kernel_single_k(%arg0: i32, %arg1: i32, %arg2: memref<8x128xf32, #tpu.memory_space<vmem>>, %arg3: memref<128x128xf32, #tpu.memory_space<vmem>>, %arg4: memref<1x128xf32, #tpu.memory_space<vmem>>, %arg5: memref<8x128xf32, #tpu.memory_space<vmem>>) attributes {dimension_semantics = [#tpu.dimension_semantics<parallel>, #tpu.dimension_semantics<parallel>], iteration_bounds = array<i64: 1, 1>, scalar_prefetch = 0 : i64, scratch_operands = 0 : i64, tpu.core_type = #tpu.core_type<tc>, window_params = [{transform_indices = @transform_0, window_bounds = array<i64: 8, 128>}, {transform_indices = @transform_1, window_bounds = array<i64: 128, 128>}, {transform_indices = @transform_2, window_bounds = array<i64: 1, 128>}, {transform_indices = @transform_3, window_bounds = array<i64: 8, 128>}]} {
    %c0 = arith.constant 0 : index
    %c0_0 = arith.constant 0 : index
    %0 = vector.load %arg2[%c0, %c0_0] : memref<8x128xf32, #tpu.memory_space<vmem>>, vector<8x128xf32>
    %c0_1 = arith.constant 0 : index
    %c0_2 = arith.constant 0 : index
    %1 = vector.load %arg3[%c0_1, %c0_2] : memref<128x128xf32, #tpu.memory_space<vmem>>, vector<128x128xf32>
    %cst = arith.constant dense<0.000000e+00> : vector<8x128xf32>
    %2 = tpu.matmul %0, %1, %cst {dimension_numbers = #tpu.dot_dimension_numbers<[1], [0], [0], [1], [0, 0, 1, 1], [], []>} : vector<8x128xf32>, vector<128x128xf32>, vector<8x128xf32> -> vector<8x128xf32>
    %c0_3 = arith.constant 0 : index
    %c0_4 = arith.constant 0 : index
    %3 = vector.load %arg4[%c0_3, %c0_4] : memref<1x128xf32, #tpu.memory_space<vmem>>, vector<1x128xf32>
    %4 = vector.broadcast %3 : vector<1x128xf32> to vector<8x128xf32>
    %5 = arith.addf %2, %4 : vector<8x128xf32>
    %c0_5 = arith.constant 0 : index
    %c0_6 = arith.constant 0 : index
    %6 = vector.load %arg5[%c0_5, %c0_6] : memref<8x128xf32, #tpu.memory_space<vmem>>, vector<8x128xf32>
    tpu.vector_store %arg5[%c0_5, %c0_6], %5 {strides = array<i32>} : memref<8x128xf32, #tpu.memory_space<vmem>>, vector<8x128xf32>,
    return
  }
  func.func @transform_0(%arg0: i32, %arg1: i32) -> (i32, i32) {
    %c0_i32 = arith.constant 0 : i32
    %c0_i32_0 = arith.constant 0 : i32
    return %arg0, %c0_i32 : i32, i32
  }
  func.func @transform_1(%arg0: i32, %arg1: i32) -> (i32, i32) {
    %c0_i32 = arith.constant 0 : i32
    %c0_i32_0 = arith.constant 0 : i32
    return %c0_i32, %arg1 : i32, i32
  }
  func.func @transform_2(%arg0: i32, %arg1: i32) -> (i32, i32) {
    %c0_i32 = arith.constant 0 : i32
    %c0_i32_0 = arith.constant 0 : i32
    return %c0_i32, %arg1 : i32, i32
  }
  func.func @transform_3(%arg0: i32, %arg1: i32) -> (i32, i32) {
    %c0_i32 = arith.constant 0 : i32
    return %arg0, %arg1 : i32, i32
  }
}

</mosaic_0001>

<llo_original>
// kernel: linear_padded.1
$region0: #{linear_padded.1}
  #allocation0 [shape = 'u32[]', space=smem, size = 0x4, offset = 0x4, fixed_abs, tag = 'smem constant byte address 0x4 - core index']
  #allocation1 [shape = 'u32[144,128]{1,0:T(1,128)}', space=vmem, size = 0x12000, scoped, tag = 'internal scratch']
  %s0 = inlined_call_operand.hbm [shape: f32[8,128], index: 0, kind: input, shape index: {}]
  %s1 = inlined_call_operand.hbm [shape: f32[128,128], index: 1, kind: input, shape index: {}]
  %s2 = inlined_call_operand.vmem [shape: f32[1,128], index: 2, kind: input, shape index: {}]
  %s3 = inlined_call_operand.hbm [shape: f32[8,128], index: 3, kind: output, shape index: {}]
  %s4 = sld [smem:[#allocation0]]
  $region30: #{linear_padded.1} parent=0
    _
  %s6 = ssub.s32 1, %s4
  %s7 = scalar_select 0, %s6, %s4
  $region1: #{linear_padded.1} parent=0
    #allocation2 [shape = 'u8[4096]{0}', space=vmem, size = 0x1000, scoped, tag = 'input window, operand 0, single buffered']
    #allocation3 [shape = 's32[1]{0}', space=sflag, size = 0x4, scoped, tag = 'scoped memory for linear_padded.1']
    #allocation4 [shape = 's32[1]{0}', space=sflag, size = 0x4, scoped, tag = 'scoped memory for linear_padded.1']
    #allocation5 [shape = 'u8[65536]{0}', space=vmem, size = 0x10000, scoped, tag = 'input window, operand 1, single buffered']
    #allocation6 [shape = 's32[1]{0}', space=sflag, size = 0x4, scoped, tag = 'scoped memory for linear_padded.1']
    #allocation7 [shape = 'u8[4096]{0}', space=vmem, size = 0x1000, scoped, tag = 'output window, operand 0, single buffered']
    %8 = vsyncpa [#allocation3], 0
    %9 = vsyncpa [#allocation6], 0
    %10 = vsyncpa [#allocation4], 0
    // Predicated region
    $region2: #{linear_padded.1} parent=1 // pred_check
      _
    $region3: #{linear_padded.1} parent=1 // pred_check_branch
      %12 = sbr.rel (0) target = $region5
    $region4: #{linear_padded.1} parent=1 // pred_region
      %s14 = ssub.s32 128, 128
      %15 = vsyncadd [#allocation3], %s14
      %s17 = sshll.u32 [#allocation2], 4
      %s18 = int_to_ptr.vmem [resolvable:$true] %s17
      %20 = dma.hbm_to_vmem [thread:$0]  %s0, 128, %s18, [#allocation3]
    $region5: #{linear_padded.1} parent=1 // pred_fallthru
      _
    // Predicated region
    $region6: #{linear_padded.1} parent=1 // pred_check
      _
    $region7: #{linear_padded.1} parent=1 // pred_check_branch
      %22 = sbr.rel (0) target = $region9
    $region8: #{linear_padded.1} parent=1 // pred_region
      %s24 = ssub.s32 2048, 2048
      %25 = vsyncadd [#allocation6], %s24
      %s26 = sshll.u32 [#allocation5], 4
      %s27 = int_to_ptr.vmem [resolvable:$true] %s26
      %32 = dma.hbm_to_vmem [thread:$0]  %s1, 2048, %s27, [#allocation6], 128, 128, 8
    $region9: #{linear_padded.1} parent=1 // pred_fallthru
      _
    // Predicated region
    $region10: #{linear_padded.1} parent=1 // pred_check
      _
    $region11: #{linear_padded.1} parent=1 // pred_check_branch
      %34 = sbr.rel (0) target = $region13
    $region12: #{linear_padded.1} parent=1 // pred_region
      _
    $region13: #{linear_padded.1} parent=1 // pred_fallthru
      _
    // Predicated region
    $region14: #{linear_padded.1} parent=1 // pred_check
      _
    $region15: #{linear_padded.1} parent=1 // pred_check_branch
      %36 = sbr.rel (0) target = $region17
    $region16: #{linear_padded.1} parent=1 // pred_region
      %37 = dma.done [#allocation3], 128
    $region17: #{linear_padded.1} parent=1 // pred_fallthru
      _
    // Predicated region
    $region18: #{linear_padded.1} parent=1 // pred_check
      _
    $region19: #{linear_padded.1} parent=1 // pred_check_branch
      %39 = sbr.rel (0) target = $region21
    $region20: #{linear_padded.1} parent=1 // pred_region
      %40 = dma.done [#allocation6], 2048
    $region21: #{linear_padded.1} parent=1 // pred_fallthru
      _
    %v41 = vld [vmem:[#allocation2] sm:$0xff]
    %v42 = vld [vmem:[#allocation5] sm:$0xff]
    %v43 = vld [vmem:[#allocation5 + $0x8] sm:$0xff]
    %v44 = vld [vmem:[#allocation5 + $0x10] sm:$0xff]
    %v45 = vld [vmem:[#allocation5 + $0x18] sm:$0xff]
    %v46 = vld [vmem:[#allocation5 + $0x20] sm:$0xff]
    %v47 = vld [vmem:[#allocation5 + $0x28] sm:$0xff]
    %v48 = vld [vmem:[#allocation5 + $0x30] sm:$0xff]
    %v49 = vld [vmem:[#allocation5 + $0x38] sm:$0xff]
    %v50 = vld [vmem:[#allocation5 + $0x40] sm:$0xff]
    %v51 = vld [vmem:[#allocation5 + $0x48] sm:$0xff]
    %v52 = vld [vmem:[#allocation5 + $0x50] sm:$0xff]
    %v53 = vld [vmem:[#allocation5 + $0x58] sm:$0xff]
    %v54 = vld [vmem:[#allocation5 + $0x60] sm:$0xff]
    %v55 = vld [vmem:[#allocation5 + $0x68] sm:$0xff]
    %v56 = vld [vmem:[#allocation5 + $0x70] sm:$0xff]
    %v57 = vld [vmem:[#allocation5 + $0x78] sm:$0xff]
    %v58 = vld [vmem:[%s2] sm:$0x1]
    %v60 = vlaneseq
    %v61 = vshrl.u32 %v60, 7
    %v62 = vsub.s32 0, %v61
    %v63 = vrot.slane %v58, %v62
    %65 = vmatprep.subr.mxu0 0.0
    %66 = vmatpush1.msra.mxu0 %v42
    %67 = vmatprep.subr.mxu0 0.0
    %68 = vmatpush1.msra.mxu0 %v43
    %69 = vmatprep.subr.mxu0 0.0
    %70 = vmatpush1.msra.mxu0 %v44
    %71 = vmatprep.subr.mxu0 0.0
    %72 = vmatpush1.msra.mxu0 %v45
    %73 = vmatprep.subr.mxu0 0.0
    %74 = vmatpush1.msra.mxu0 %v46
    %75 = vmatprep.subr.mxu0 0.0
    %76 = vmatpush1.msra.mxu0 %v47
    %77 = vmatprep.subr.mxu0 0.0
    %78 = vmatpush1.msra.mxu0 %v48
    %79 = vmatprep.subr.mxu0 0.0
    %80 = vmatpush1.msra.mxu0 %v49
    %81 = vmatprep.subr.mxu0 0.0
    %82 = vmatpush1.msra.mxu0 %v50
    %83 = vmatprep.subr.mxu0 0.0
    %84 = vmatpush1.msra.mxu0 %v51
    %85 = vmatprep.subr.mxu0 0.0
    %86 = vmatpush1.msra.mxu0 %v52
    %87 = vmatprep.subr.mxu0 0.0
    %88 = vmatpush1.msra.mxu0 %v53
    %89 = vmatprep.subr.mxu0 0.0
    %90 = vmatpush1.msra.mxu0 %v54
    %91 = vmatprep.subr.mxu0 0.0
    %92 = vmatpush1.msra.mxu0 %v55
    %93 = vmatprep.subr.mxu0 0.0
    %94 = vmatpush1.msra.mxu0 %v56
    %95 = vmatprep.subr.mxu0 0.0
    %96 = vmatpush1.msra.mxu0 %v57
    %97 = vmatprep.subr.mxu0 0.0
    %98 = vmatpush1.msra.mxu0 0.0
    %99 = vmatprep.subr.mxu0 0.0
    %100 = vmatpush1.msra.mxu0 0.0
    %101 = vmatprep.subr.mxu0 0.0
    %102 = vmatpush1.msra.mxu0 0.0
    %103 = vmatprep.subr.mxu0 0.0
    %104 = vmatpush1.msra.mxu0 0.0
    %105 = vmatprep.subr.mxu0 0.0
    %106 = vmatpush1.msra.mxu0 0.0
    %107 = vmatprep.subr.mxu0 0.0
    %108 = vmatpush1.msra.mxu0 0.0
    %109 = vmatprep.subr.mxu0 0.0
    %110 = vmatpush1.msra.mxu0 0.0
    %111 = vmatprep.subr.mxu0 0.0
    %112 = vmatpush1.msra.mxu0 0.0
    %113 = vmatprep.subr.mxu0 0.0
    %114 = vmatpush1.msra.mxu0 0.0
    %115 = vmatprep.subr.mxu0 0.0
    %116 = vmatpush1.msra.mxu0 0.0
    %117 = vmatprep.subr.mxu0 0.0
    %118 = vmatpush1.msra.mxu0 0.0
    %119 = vmatprep.subr.mxu0 0.0
    %120 = vmatpush1.msra.mxu0 0.0
    %121 = vmatprep.subr.mxu0 0.0
    %122 = vmatpush1.msra.mxu0 0.0
    %123 = vmatprep.subr.mxu0 0.0
    %124 = vmatpush1.msra.mxu0 0.0
    %125 = vmatprep.subr.mxu0 0.0
    %126 = vmatpush1.msra.mxu0 0.0
    %127 = vmatprep.subr.mxu0 0.0
    %128 = vmatpush1.msra.mxu0 0.0
    %129 = vmatprep.mubr.f32.mxu0 0.0
    %130 = vmatmul.mubr.f32.gmra.mrb[0].mxu0 %v41
    %v131 = vpop.f32.mrb[0].mxu0
    %v132 = vadd.f32 %v63, %v131
    %v133 = vpop.f32.mrb[0].mxu0
    %134 = vdwg.mxu0
    %135 = vst [vmem:[#allocation7] sm:$0xff] %v132
    // Predicated region
    $region22: #{linear_padded.1} parent=1 // pred_check
      _
    $region23: #{linear_padded.1} parent=1 // pred_check_branch
      %137 = sbr.rel (0) target = $region25
    $region24: #{linear_padded.1} parent=1 // pred_region
      %s139 = ssub.s32 128, 128
      %140 = vsyncadd [#allocation4], %s139
      %s142 = sshll.u32 [#allocation7], 4
      %s143 = int_to_ptr.vmem [resolvable:$true] %s142
      %145 = dma.vmem_to_hbm [thread:$0]  %s143, 128, %s3, [#allocation4]
    $region25: #{linear_padded.1} parent=1 // pred_fallthru
      _
    // Predicated region
    $region26: #{linear_padded.1} parent=1 // pred_check
      _
    $region27: #{linear_padded.1} parent=1 // pred_check_branch
      %147 = sbr.rel (0) target = $region29
    $region28: #{linear_padded.1} parent=1 // pred_region
      %148 = dma.done [#allocation4], 128
    $region29: #{linear_padded.1} parent=1 // pred_fallthru
      _
    %149 = vsyncpa [#allocation3], 1
    %150 = vsyncpa [#allocation6], 1
    %151 = vsyncpa [#allocation4], 1

</llo_original>
